<compile_context>
chip_gen: v7x
topology: tpu7x:2x2x1
jax: 0.10.0
libtpu: 0.0.40
codegen_flags: <defaults>
</compile_context>

<pallas_src>
import jax
import jax.numpy as jnp
from jax.experimental import pallas as pl
from jax.experimental.pallas import tpu as pltpu


_MXU_DTYPE = jnp.bfloat16  # MXU-native on v5e/v6e/v7x; f32 matmul is multi-pass emulation.


def _round_up(x, m):
    return ((x + m - 1) // m) * m


def _vmem_budget_bytes():
    """Generation-aware VMEM working-set budget and scoped-vmem limit."""
    try:
        cap = int(pltpu.get_tpu_info().vmem_capacity_bytes)
    except Exception:
        cap = 64 * 1024 * 1024  # conservative fallback (v7x: 64 MiB per TensorCore)
    budget = (cap * 3) // 4                      # ~48 MiB on v7x, ~96 MiB on v5e/v6e
    limit = min(cap - (4 << 20), budget + (8 << 20))
    return budget, max(limit, 32 << 20)


# ----------------------------------------------------------------------------- kernels


def fc_single_pass_kernel(feat_ref, wt_ref, b_ref, o_ref):
    """Resident-weight path: full K in one MXU pass; bias fused into the store."""
    o_ref[...] = (
        jnp.dot(feat_ref[...], wt_ref[...], preferred_element_type=jnp.float32)
        + b_ref[...]
    ).astype(o_ref.dtype)


def fc_reduce_kernel(feat_ref, wt_ref, b_ref, o_ref, acc_ref):
    """Fallback path for very large heads: accumulate over the K grid axis in f32."""
    k = pl.program_id(2)

    @pl.when(k == 0)
    def _():
        # Seed the accumulator with the broadcast bias -> no epilogue add needed.
        acc_ref[...] = jnp.broadcast_to(b_ref[...].astype(jnp.float32), acc_ref.shape)

    acc_ref[...] += jnp.dot(
        feat_ref[...], wt_ref[...], preferred_element_type=jnp.float32
    )

    @pl.when(k == pl.num_programs(2) - 1)
    def _():
        o_ref[...] = acc_ref[...].astype(o_ref.dtype)


# ---------------------------------------------------------------------- param prep / call


def prepare_fc_params(weight, bias):
    """One-time prep of the FROZEN fc parameters (outside the per-call hot path).

    weight: [num_class, dim_in], bias: [num_class]
    Returns (w_t_padded [Dp, NCp] bf16, bias_padded [1, NCp] f32) with Dp, NCp multiples
    of 128, so the per-forward path never transposes/casts the weight again and the
    output lane dimension is 128-aligned.
    """
    nc, d = weight.shape
    dp = _round_up(d, 128)
    ncp = _round_up(nc, 128)
    w_t = (
        jnp.zeros((dp, ncp), dtype=_MXU_DTYPE)
        .at[:d, :nc]
        .set(weight.T.astype(_MXU_DTYPE))
    )
    b2 = (
        jnp.zeros((1, ncp), dtype=jnp.float32)
        .at[0, :nc]
        .set(bias.astype(jnp.float32))
    )
    return w_t, b2


def linear_head_fc(feat, w_t_padded, bias_padded, num_class):
    """feat: [B, dim_in]; w_t_padded: [Dp, NCp] bf16; bias_padded: [1, NCp] -> [B, num_class]."""
    b, d = feat.shape
    dp, ncp = w_t_padded.shape
    in_dsize = jnp.dtype(_MXU_DTYPE).itemsize
    out_dtype = feat.dtype
    out_dsize = jnp.dtype(out_dtype).itemsize

    budget, vmem_limit = _vmem_budget_bytes()

    # bf16 tiles: sublane-dim block sizes must be multiples of 16.
    bp = _round_up(max(b, 16), 16)
    tm_cands = (1024, 512, 256, 128, 64, 32, 16)
    tn_cands = (4096, 2048, 1024, 512, 256, 128)
    tk_cands = (4096, 2048, 1024, 512, 256, 128)

    # feat: cast to the MXU dtype, pad rows/cols only as needed (zeros don't affect the dot).
    feat_p = feat.astype(_MXU_DTYPE)
    if bp != b or dp != d:
        feat_p = jnp.pad(feat_p, ((0, bp - b), (0, dp - d)))

    def resident_bytes(tm):
        # feat (double-buffered) + W^T (counted 2x to be safe) + bias + output.
        return (
            2 * tm * dp * in_dsize
            + 2 * dp * ncp * in_dsize
            + 2 * ncp * 4
            + 2 * tm * ncp * out_dsize
        )

    if resident_bytes(16) <= budget:
        # ---------------- resident-weight single-pass path (common classification head)
        tm = max(t for t in tm_cands if bp % t == 0 and resident_bytes(t) <= budget)
        tn = ncp
        # Expose >=2 parallel blocks so both v7x TensorCores get work (harmless on 1-TC gens).
        if (bp // tm) == 1 and ncp % 256 == 0:
            tn = ncp // 2
        grid = (bp // tm, ncp // tn)

        out_p = pl.pallas_call(
            fc_single_pass_kernel,
            out_shape=jax.ShapeDtypeStruct((bp, ncp), out_dtype),
            grid_spec=pltpu.PrefetchScalarGridSpec(
                num_scalar_prefetch=0,
                grid=grid,
                in_specs=[
                    pl.BlockSpec((tm, dp), lambda i, j: (i, 0)),   # feat tile (full K)
                    pl.BlockSpec((dp, tn), lambda i, j: (0, j)),   # W^T, resident across i
                    pl.BlockSpec((1, tn), lambda i, j: (0, j)),    # bias
                ],
                out_specs=pl.BlockSpec((tm, tn), lambda i, j: (i, j)),
            ),
            compiler_params=pltpu.CompilerParams(
                dimension_semantics=("parallel", "parallel"),
                vmem_limit_bytes=vmem_limit,
            ),
        )(feat_p, w_t_padded, bias_padded)
    else:
        # ---------------- large-head fallback: 3-D grid, K reduction last, f32 accumulator
        def fits(tm, tn, tk):
            return (
                2 * (tm * tk + tk * tn) * in_dsize   # feat + W^T double-buffered
                + 2 * tn * 4                         # bias
                + tm * tn * 4                        # f32 accumulator scratch
                + 2 * tm * tn * out_dsize            # output double-buffered
            ) <= budget

        tm = max(t for t in tm_cands if bp % t == 0 and fits(t, 128, 128))
        tk = max(t for t in tk_cands if dp % t == 0 and fits(tm, 128, t))
        tn = max(t for t in tn_cands if ncp % t == 0 and fits(tm, t, tk))
        grid = (bp // tm, ncp // tn, dp // tk)

        out_p = pl.pallas_call(
            fc_reduce_kernel,
            out_shape=jax.ShapeDtypeStruct((bp, ncp), out_dtype),
            grid_spec=pltpu.PrefetchScalarGridSpec(
                num_scalar_prefetch=0,
                grid=grid,
                in_specs=[
                    pl.BlockSpec((tm, tk), lambda i, j, k: (i, k)),   # feat tile
                    pl.BlockSpec((tk, tn), lambda i, j, k: (k, j)),   # W^T tile
                    pl.BlockSpec((1, tn), lambda i, j, k: (0, j)),    # bias tile
                ],
                out_specs=pl.BlockSpec((tm, tn), lambda i, j, k: (i, j)),
                scratch_shapes=[pltpu.VMEM((tm, tn), jnp.float32)],
            ),
            compiler_params=pltpu.CompilerParams(
                dimension_semantics=("parallel", "parallel", "arbitrary"),
                vmem_limit_bytes=vmem_limit,
            ),
        )(feat_p, w_t_padded, bias_padded)

    return out_p[:b, :num_class]


def backbone_feat(x, proj):
    # TODO(synk): `self.net` is an arbitrary frozen backbone whose architecture is not
    # given; stand-in = global average pool (NCHW -> [B, C]) + fixed projection to dim_in.
    pooled = jnp.mean(x, axis=(2, 3))            # [B, C]
    return pooled @ proj                          # [B, dim_in]


def linear_head_forward(x, proj, w_t_padded, bias_padded, num_class):
    feat = jax.lax.stop_gradient(backbone_feat(x, proj))   # mirrors torch.no_grad()
    return linear_head_fc(feat, w_t_padded, bias_padded, num_class)


if __name__ == "__main__":
    key = jax.random.PRNGKey(0)
    B, C, H, W = 2, 4, 16, 16
    dim_in, num_class = 32, 10

    k_x, k_proj, k_w = jax.random.split(key, 3)
    x = jax.random.normal(k_x, (B, C, H, W), dtype=jnp.float32)

    # Deterministic parameter init (matches module __init__ semantics):
    #   fc.weight ~ N(0, 0.01), fc.bias = 0
    proj = jax.random.normal(k_proj, (C, dim_in), dtype=jnp.float32) * 0.1
    fc_weight = jax.random.normal(k_w, (num_class, dim_in), dtype=jnp.float32) * 0.01
    fc_bias = jnp.zeros((num_class,), dtype=jnp.float32)

    # One-time frozen-parameter prep (transpose + 128-pad + bf16 cast), out of the hot path.
    w_t_padded, bias_padded = prepare_fc_params(fc_weight, fc_bias)
    w_t_padded = jax.block_until_ready(w_t_padded)
    bias_padded = jax.block_until_ready(bias_padded)

    fwd = jax.jit(
        lambda x_: linear_head_forward(x_, proj, w_t_padded, bias_padded, num_class)
    )
    out = jax.block_until_ready(fwd(x))

    # Reference check (plain JAX, f32) for the fc hot path; tolerance covers bf16 inputs.
    feat_ref = jnp.mean(x, axis=(2, 3)) @ proj
    ref = feat_ref @ fc_weight.T + fc_bias
    assert out.shape == (B, num_class)
    assert jnp.allclose(out, ref, atol=1e-4, rtol=5e-2)

    print("KERNEL_OK")
</pallas_src>

<mosaic_0001>
module attributes {stable_mosaic.version = 11 : i64} {
  func.func @fc_single_pass_kernel(%arg0: i32, %arg1: i32, %arg2: memref<16x128xbf16, #tpu.memory_space<vmem>>, %arg3: memref<128x128xbf16, #tpu.memory_space<vmem>>, %arg4: memref<1x128xf32, #tpu.memory_space<vmem>>, %arg5: memref<16x128xf32, #tpu.memory_space<vmem>>) attributes {dimension_semantics = [#tpu.dimension_semantics<parallel>, #tpu.dimension_semantics<parallel>], iteration_bounds = array<i64: 1, 1>, scalar_prefetch = 0 : i64, scratch_operands = 0 : i64, tpu.core_type = #tpu.core_type<tc>, window_params = [{transform_indices = @transform_0, window_bounds = array<i64: 16, 128>}, {transform_indices = @transform_1, window_bounds = array<i64: 128, 128>}, {transform_indices = @transform_2, window_bounds = array<i64: 1, 128>}, {transform_indices = @transform_3, window_bounds = array<i64: 16, 128>}]} {
    %c0 = arith.constant 0 : index
    %c0_0 = arith.constant 0 : index
    %0 = vector.load %arg2[%c0, %c0_0] : memref<16x128xbf16, #tpu.memory_space<vmem>>, vector<16x128xbf16>
    %c0_1 = arith.constant 0 : index
    %c0_2 = arith.constant 0 : index
    %1 = vector.load %arg3[%c0_1, %c0_2] : memref<128x128xbf16, #tpu.memory_space<vmem>>, vector<128x128xbf16>
    %cst = arith.constant dense<0.000000e+00> : vector<16x128xf32>
    %2 = tpu.matmul %0, %1, %cst {dimension_numbers = #tpu.dot_dimension_numbers<[1], [0], [0], [1], [0, 0, 1, 1], [], []>} : vector<16x128xbf16>, vector<128x128xbf16>, vector<16x128xf32> -> vector<16x128xf32>
    %c0_3 = arith.constant 0 : index
    %c0_4 = arith.constant 0 : index
    %3 = vector.load %arg4[%c0_3, %c0_4] : memref<1x128xf32, #tpu.memory_space<vmem>>, vector<1x128xf32>
    %4 = vector.broadcast %3 : vector<1x128xf32> to vector<16x128xf32>
    %5 = arith.addf %2, %4 : vector<16x128xf32>
    %c0_5 = arith.constant 0 : index
    %c0_6 = arith.constant 0 : index
    %6 = vector.load %arg5[%c0_5, %c0_6] : memref<16x128xf32, #tpu.memory_space<vmem>>, vector<16x128xf32>
    tpu.vector_store %arg5[%c0_5, %c0_6], %5 {strides = array<i32>} : memref<16x128xf32, #tpu.memory_space<vmem>>, vector<16x128xf32>,
    return
  }
  func.func @transform_0(%arg0: i32, %arg1: i32) -> (i32, i32) {
    %c0_i32 = arith.constant 0 : i32
    %c0_i32_0 = arith.constant 0 : i32
    return %arg0, %c0_i32 : i32, i32
  }
  func.func @transform_1(%arg0: i32, %arg1: i32) -> (i32, i32) {
    %c0_i32 = arith.constant 0 : i32
    %c0_i32_0 = arith.constant 0 : i32
    return %c0_i32, %arg1 : i32, i32
  }
  func.func @transform_2(%arg0: i32, %arg1: i32) -> (i32, i32) {
    %c0_i32 = arith.constant 0 : i32
    %c0_i32_0 = arith.constant 0 : i32
    return %c0_i32, %arg1 : i32, i32
  }
  func.func @transform_3(%arg0: i32, %arg1: i32) -> (i32, i32) {
    %c0_i32 = arith.constant 0 : i32
    return %arg0, %arg1 : i32, i32
  }
}

</mosaic_0001>

<llo_original>
// kernel: _lambda_.1
$region0: #{_lambda_.1}
  #allocation0 [shape = 'u32[]', space=smem, size = 0x4, offset = 0x4, fixed_abs, tag = 'smem constant byte address 0x4 - core index']
  #allocation1 [shape = 'u32[144,128]{1,0:T(1,128)}', space=vmem, size = 0x12000, scoped, tag = 'internal scratch']
  %s0 = inlined_call_operand.vmem [shape: bf16[16,128], index: 0, kind: input, shape index: {}]
  %s1 = inlined_call_operand.vmem [shape: bf16[128,128], index: 1, kind: input, shape index: {}]
  %s2 = inlined_call_operand.vmem [shape: f32[1,128], index: 2, kind: input, shape index: {}]
  %s3 = inlined_call_operand.vmem [shape: f32[16,128], index: 3, kind: output, shape index: {}]
  %s4 = sld [smem:[#allocation0]]
  $region22: #{_lambda_.1} parent=0
    _
  %s6 = ssub.s32 1, %s4
  %s7 = scalar_select 0, %s6, %s4
  // Predicated region
  $region2: #{_lambda_.1} parent=0 // pred_check
    _
  $region3: #{_lambda_.1} parent=0 // pred_check_branch
    %9 = sbr.rel (0) target = $region5
  $region4: #{_lambda_.1} parent=0 // pred_region
    _
  $region5: #{_lambda_.1} parent=0 // pred_fallthru
    _
  // Predicated region
  $region6: #{_lambda_.1} parent=0 // pred_check
    _
  $region7: #{_lambda_.1} parent=0 // pred_check_branch
    %11 = sbr.rel (0) target = $region9
  $region8: #{_lambda_.1} parent=0 // pred_region
    _
  $region9: #{_lambda_.1} parent=0 // pred_fallthru
    _
  // Predicated region
  $region10: #{_lambda_.1} parent=0 // pred_check
    _
  $region11: #{_lambda_.1} parent=0 // pred_check_branch
    %13 = sbr.rel (0) target = $region13
  $region12: #{_lambda_.1} parent=0 // pred_region
    _
  $region13: #{_lambda_.1} parent=0 // pred_fallthru
    _
  %v15 = vld [vmem:[%s0] sm:$0xf]
  %v16 = vld [vmem:[%s0 + $0x4] sm:$0xf]
  %v17 = vld [vmem:[%s1] sm:$0xf]
  %v18 = vld [vmem:[%s1 + $0x4] sm:$0xf]
  %v19 = vld [vmem:[%s1 + $0x8] sm:$0xf]
  %v20 = vld [vmem:[%s1 + $0xc] sm:$0xf]
  %v21 = vld [vmem:[%s1 + $0x10] sm:$0xf]
  %v22 = vld [vmem:[%s1 + $0x14] sm:$0xf]
  %v23 = vld [vmem:[%s1 + $0x18] sm:$0xf]
  %v24 = vld [vmem:[%s1 + $0x1c] sm:$0xf]
  %v25 = vld [vmem:[%s1 + $0x20] sm:$0xf]
  %v26 = vld [vmem:[%s1 + $0x24] sm:$0xf]
  %v27 = vld [vmem:[%s1 + $0x28] sm:$0xf]
  %v28 = vld [vmem:[%s1 + $0x2c] sm:$0xf]
  %v29 = vld [vmem:[%s1 + $0x30] sm:$0xf]
  %v30 = vld [vmem:[%s1 + $0x34] sm:$0xf]
  %v31 = vld [vmem:[%s1 + $0x38] sm:$0xf]
  %v32 = vld [vmem:[%s1 + $0x3c] sm:$0xf]
  %v33 = vld [vmem:[%s2] sm:$0x1]
  %v35 = vlaneseq
  %v36 = vshrl.u32 %v35, 7
  %v37 = vsub.s32 0, %v36
  %v38 = vrot.slane %v33, %v37
  %v42 = vunpack.c.l.b16 %v15
  %v43 = vunpack.c.l.b16 %v16
  %v44 = vpack.c.b16 %v43, %v42
  %v62 = vunpack.c.l.b16 %v17
  %v63 = vunpack.c.l.b16 %v18
  %v64 = vunpack.c.l.b16 %v19
  %v65 = vunpack.c.l.b16 %v20
  %v66 = vunpack.c.l.b16 %v21
  %v67 = vunpack.c.l.b16 %v22
  %v68 = vunpack.c.l.b16 %v23
  %v69 = vunpack.c.l.b16 %v24
  %v70 = vunpack.c.l.b16 %v25
  %v71 = vunpack.c.l.b16 %v26
  %v72 = vunpack.c.l.b16 %v27
  %v73 = vunpack.c.l.b16 %v28
  %v74 = vunpack.c.l.b16 %v29
  %v75 = vunpack.c.l.b16 %v30
  %v76 = vunpack.c.l.b16 %v31
  %v77 = vunpack.c.l.b16 %v32
  %v78 = vpack.c.b16 %v63, %v62
  %v79 = vpack.c.b16 %v65, %v64
  %v80 = vpack.c.b16 %v67, %v66
  %v81 = vpack.c.b16 %v69, %v68
  %v82 = vpack.c.b16 %v71, %v70
  %v83 = vpack.c.b16 %v73, %v72
  %v84 = vpack.c.b16 %v75, %v74
  %v85 = vpack.c.b16 %v77, %v76
  %94 = vmatprep.subr.bf16.mxu0 0
  %95 = vmatpush1.bf16.msra.mxu0 %v78
  %96 = vmatprep.subr.bf16.mxu0 0
  %97 = vmatpush1.bf16.msra.mxu0 %v79
  %98 = vmatprep.subr.bf16.mxu0 0
  %99 = vmatpush1.bf16.msra.mxu0 %v80
  %100 = vmatprep.subr.bf16.mxu0 0
  %101 = vmatpush1.bf16.msra.mxu0 %v81
  %102 = vmatprep.subr.bf16.mxu0 0
  %103 = vmatpush1.bf16.msra.mxu0 %v82
  %104 = vmatprep.subr.bf16.mxu0 0
  %105 = vmatpush1.bf16.msra.mxu0 %v83
  %106 = vmatprep.subr.bf16.mxu0 0
  %107 = vmatpush1.bf16.msra.mxu0 %v84
  %108 = vmatprep.subr.bf16.mxu0 0
  %109 = vmatpush1.bf16.msra.mxu0 %v85
  %110 = vmatprep.subr.bf16.mxu0 0
  %111 = vmatpush1.bf16.msra.mxu0 0
  %112 = vmatprep.subr.bf16.mxu0 0
  %113 = vmatpush1.bf16.msra.mxu0 0
  %114 = vmatprep.subr.bf16.mxu0 0
  %115 = vmatpush1.bf16.msra.mxu0 0
  %116 = vmatprep.subr.bf16.mxu0 0
  %117 = vmatpush1.bf16.msra.mxu0 0
  %118 = vmatprep.subr.bf16.mxu0 0
  %119 = vmatpush1.bf16.msra.mxu0 0
  %120 = vmatprep.subr.bf16.mxu0 0
  %121 = vmatpush1.bf16.msra.mxu0 0
  %122 = vmatprep.subr.bf16.mxu0 0
  %123 = vmatpush1.bf16.msra.mxu0 0
  %124 = vmatprep.subr.bf16.mxu0 0
  %125 = vmatpush1.bf16.msra.mxu0 0
  %126 = vmatprep.mubr.bf16.mxu0 0
  %127 = vmatmul.mubr.bf16.gmra.mrb[0].mxu0 %v44
  %v128 = vpop.f32.mrb[0].mxu0
  %v129 = vadd.f32 %v38, %v128
  %v130 = vpop.f32.mrb[0].mxu0
  %v131 = vpop.f32.mrb[0].mxu0
  %v132 = vadd.f32 %v38, %v131
  %v133 = vpop.f32.mrb[0].mxu0
  %134 = vdwg.mxu0
  %135 = vst [vmem:[%s3] sm:$0xff] %v129
  %136 = vst [vmem:[%s3 + $0x8] sm:$0xff] %v132
  // Predicated region
  $region14: #{_lambda_.1} parent=0 // pred_check
    _
  $region15: #{_lambda_.1} parent=0 // pred_check_branch
    %138 = sbr.rel (0) target = $region17
  $region16: #{_lambda_.1} parent=0 // pred_region
    _
  $region17: #{_lambda_.1} parent=0 // pred_fallthru
    _
  // Predicated region
  $region18: #{_lambda_.1} parent=0 // pred_check
    _
  $region19: #{_lambda_.1} parent=0 // pred_check_branch
    %140 = sbr.rel (0) target = $region21
  $region20: #{_lambda_.1} parent=0 // pred_region
    _
  $region21: #{_lambda_.1} parent=0 // pred_fallthru
    _

</llo_original>
